<compile_context>
chip_gen: v7x
topology: tpu7x:2x2x1
jax: 0.10.0
libtpu: 0.0.40
codegen_flags: <defaults>
</compile_context>

<pallas_src>
import functools

import jax
import jax.numpy as jnp
from jax.experimental import pallas as pl
from jax.experimental.pallas import tpu as pltpu


# ------------------------------------------------------------------
# Fused kernel: GroupNorm(eps=1e-6, affine) + SiLU + Conv3x3(pad=1) + bias
#               [+ residual add | + 1x1-conv shortcut]
# One batch element per grid step; input/output are flattened (N, H*W, C).
# ------------------------------------------------------------------
def _fused_gn_silu_conv3x3_kernel(*refs, H, W, mode, compute_dtype):
    """refs = (x, gamma, beta, memb, w9, bias, mask_l, mask_r,
               [res], [nin_w], out, pad_scratch)

    mode == "bias": out = conv(gnsilu(x)) + bias                 (conv1 + temb)
    mode == "add" : out = conv(gnsilu(x)) + bias + res           (conv2, Cin==Cout)
    mode == "nin" : out = conv(gnsilu(x)) + bias + res @ nin_w   (conv2 + 1x1 shortcut)
    """
    pad_ref = refs[-1]
    o_ref = refs[-2]
    (x_ref, gamma_ref, beta_ref, memb_ref, w_ref, bias_ref,
     mask_l_ref, mask_r_ref) = refs[:8]
    if mode == "add":
        res_ref = refs[8]
    elif mode == "nin":
        res_ref, nin_w_ref = refs[8], refs[9]

    HW = H * W
    Cin = x_ref.shape[-1]
    Cout = w_ref.shape[-1]
    Ptot = HW + 2 * W + 2                       # rows in the padded flat scratch

    # ---------------- GroupNorm statistics (f32) ----------------
    x = x_ref[0].astype(jnp.float32)                                # (HW, Cin)
    memb = memb_ref[...]                                            # (Cin, G) one-hot
    G = memb.shape[1]
    s = jnp.sum(x, axis=0, keepdims=True)                           # (1, Cin)
    ss = jnp.sum(x * x, axis=0, keepdims=True)                      # (1, Cin)
    gs = jnp.dot(s, memb, preferred_element_type=jnp.float32)       # (1, G)
    gss = jnp.dot(ss, memb, preferred_element_type=jnp.float32)     # (1, G)
    cnt = float((Cin // G) * HW)
    mean_g = gs / cnt
    var_g = jnp.maximum(gss / cnt - mean_g * mean_g, 0.0)           # clamp >= 0
    inv_g = jax.lax.rsqrt(var_g + 1e-6)
    mean_c = jnp.dot(mean_g, memb.T, preferred_element_type=jnp.float32)  # (1, Cin)
    inv_c = jnp.dot(inv_g, memb.T, preferred_element_type=jnp.float32)    # (1, Cin)

    # ------- normalize + affine + SiLU (f32 elementwise: v5e-friendly) -------
    y = (x - mean_c) * inv_c * gamma_ref[...] + beta_ref[...]
    y = y * jax.nn.sigmoid(y)
    yc = y.astype(compute_dtype)                                    # bf16 -> MXU

    # ------------- in-kernel zero padding (rows only) -------------
    # flat scratch layout (each "row" is one pixel's channel vector):
    #   [0, W+1)        guard + top pad row      = 0
    #   [W+1, W+1+HW)   image pixels, row-major  (single contiguous store)
    #   [W+1+HW, Ptot)  bottom pad row + guard   = 0
    pad_ref[0:W + 1, :] = jnp.zeros((W + 1, Cin), compute_dtype)
    pad_ref[W + 1 + HW:Ptot, :] = jnp.zeros((W + 1, Cin), compute_dtype)
    pad_ref[W + 1:W + 1 + HW, :] = yc

    mask_l = mask_l_ref[...].astype(compute_dtype)                  # (HW, 1)
    mask_r = mask_r_ref[...].astype(compute_dtype)                  # (HW, 1)

    # --------- 3x3 conv: 9 contiguous-slab matmuls, f32 accumulation ---------
    acc = jnp.zeros((HW, Cout), jnp.float32)
    for k in range(9):
        dy, dx = k // 3, k % 3
        start = dy * W + dx                      # static offset; never OOB
        slab = pad_ref[start:start + HW, :]      # (HW, Cin) contiguous slab
        if dx == 0:
            slab = slab * mask_l                 # wrapped reads hit masked cols only
        elif dx == 2:
            slab = slab * mask_r
        acc = acc + jnp.dot(slab, w_ref[k], preferred_element_type=jnp.float32)

    acc = acc + bias_ref[0].astype(jnp.float32)                     # (1, Cout) bcast

    if mode == "add":
        acc = acc + res_ref[0].astype(jnp.float32)
    elif mode == "nin":
        acc = acc + jnp.dot(res_ref[0].astype(compute_dtype), nin_w_ref[...],
                            preferred_element_type=jnp.float32)

    o_ref[...] = acc.reshape(1, HW, Cout).astype(o_ref.dtype)


def _fused_gn_silu_conv3x3(x, gamma, beta, num_groups, w, bias, *, H, W,
                           res=None, nin_w=None,
                           compute_dtype=jnp.bfloat16, out_dtype=None):
    """x: (N, H*W, Cin). w: (3,3,Cin,Cout). bias: (Cout,) or per-batch (N, Cout).
    res: optional (N, H*W, C_res) residual; nin_w: optional (C_res, Cout)."""
    N, HW, Cin = x.shape
    Cout = w.shape[-1]
    G = num_groups
    assert HW == H * W and Cin % G == 0
    out_dtype = out_dtype or x.dtype

    memb = (jnp.arange(Cin)[:, None] // (Cin // G)
            == jnp.arange(G)[None, :]).astype(jnp.float32)          # (Cin, G)
    w9 = w.reshape(9, Cin, Cout).astype(compute_dtype)
    col = (jnp.arange(HW, dtype=jnp.int32) % W)[:, None]             # output col idx
    mask_l = (col > 0).astype(jnp.float32)                           # for dx == 0
    mask_r = (col < W - 1).astype(jnp.float32)                       # for dx == 2

    if bias.ndim == 1:
        bias = bias.reshape(1, 1, Cout)
    else:
        bias = bias.reshape(-1, 1, Cout)
    bmap = (lambda n: (0, 0, 0)) if bias.shape[0] == 1 else (lambda n: (n, 0, 0))

    inputs = [x,
              gamma.reshape(1, Cin).astype(jnp.float32),
              beta.reshape(1, Cin).astype(jnp.float32),
              memb, w9, bias, mask_l, mask_r]
    in_specs = [
        pl.BlockSpec((1, HW, Cin), lambda n: (n, 0, 0)),
        pl.BlockSpec((1, Cin), lambda n: (0, 0)),
        pl.BlockSpec((1, Cin), lambda n: (0, 0)),
        pl.BlockSpec((Cin, G), lambda n: (0, 0)),
        pl.BlockSpec((9, Cin, Cout), lambda n: (0, 0, 0)),
        pl.BlockSpec((1, 1, Cout), bmap),
        pl.BlockSpec((HW, 1), lambda n: (0, 0)),
        pl.BlockSpec((HW, 1), lambda n: (0, 0)),
    ]
    mode = "bias"
    if res is not None and nin_w is None:
        mode = "add"
        inputs.append(res)
        in_specs.append(pl.BlockSpec((1, HW, res.shape[-1]), lambda n: (n, 0, 0)))
    elif nin_w is not None:
        mode = "nin"
        inputs += [res, nin_w.astype(compute_dtype)]
        in_specs += [pl.BlockSpec((1, HW, res.shape[-1]), lambda n: (n, 0, 0)),
                     pl.BlockSpec((res.shape[-1], Cout), lambda n: (0, 0))]

    kernel = functools.partial(_fused_gn_silu_conv3x3_kernel,
                               H=H, W=W, mode=mode, compute_dtype=compute_dtype)
    return pl.pallas_call(
        kernel,
        out_shape=jax.ShapeDtypeStruct((N, HW, Cout), out_dtype),
        grid=(N,),
        in_specs=in_specs,
        out_specs=pl.BlockSpec((1, HW, Cout), lambda n: (n, 0, 0)),
        scratch_shapes=[pltpu.VMEM((HW + 2 * W + 2, Cin), compute_dtype)],
        compiler_params=pltpu.CompilerParams(
            dimension_semantics=("parallel",),
            vmem_limit_bytes=64 * 1024 * 1024),
    )(*inputs)


# ------------------------------------------------------------------
# temb_proj(silu(temb)) : tiny (N, Temb) x (Temb, Cout) linear
# ------------------------------------------------------------------
def _silu_linear_kernel(x_ref, w_ref, b_ref, o_ref):
    x = x_ref[...].astype(jnp.float32)
    x = x * jax.nn.sigmoid(x)
    o_ref[...] = (jnp.dot(x, w_ref[...].astype(jnp.float32),
                          preferred_element_type=jnp.float32)
                  + b_ref[...].astype(jnp.float32)).astype(o_ref.dtype)


def silu_linear(x, w, b):
    M, K = x.shape
    Nout = w.shape[1]
    return pl.pallas_call(
        _silu_linear_kernel,
        out_shape=jax.ShapeDtypeStruct((M, Nout), x.dtype),
        grid=(1,),
        in_specs=[
            pl.BlockSpec((M, K), lambda i: (0, 0)),
            pl.BlockSpec((K, Nout), lambda i: (0, 0)),
            pl.BlockSpec((1, Nout), lambda i: (0, 0)),
        ],
        out_specs=pl.BlockSpec((M, Nout), lambda i: (0, 0)),
    )(x, w, b.reshape(1, Nout))


# ------------------------------------------------------------------
# ResnetBlock forward (dropout p=0 -> identity)
# ------------------------------------------------------------------
def resnet_block_forward(x_nchw, temb, p, num_groups=32,
                         compute_dtype=jnp.bfloat16):
    N, Cin, H, W = x_nchw.shape
    Cout = p["w1"].shape[-1]
    x = jnp.transpose(x_nchw, (0, 2, 3, 1)).reshape(N, H * W, Cin)  # NCHW -> (N,HW,C)

    # temb_proj(silu(temb)) folded into conv1's bias -> per-batch channel bias
    t = silu_linear(temb, p["wt"], p["bt"])                          # (N, Cout)
    cb1 = t + p["b1"][None, :]

    h = _fused_gn_silu_conv3x3(x, p["gamma1"], p["beta1"], num_groups,
                               p["w1"], cb1, H=H, W=W,
                               compute_dtype=compute_dtype)          # GN1+SiLU+conv1+temb

    # dropout(p=0) is identity  # TODO(synk): module uses Dropout(0); no mask needed
    if Cin != Cout:
        bias2 = p["b2"] + p["bn"]            # fold nin_shortcut bias into conv2 bias
        out = _fused_gn_silu_conv3x3(h, p["gamma2"], p["beta2"], num_groups,
                                     p["w2"], bias2, H=H, W=W,
                                     res=x, nin_w=p["wn"],
                                     compute_dtype=compute_dtype)    # GN2+SiLU+conv2+nin+add
    else:
        out = _fused_gn_silu_conv3x3(h, p["gamma2"], p["beta2"], num_groups,
                                     p["w2"], p["b2"], H=H, W=W,
                                     res=x,
                                     compute_dtype=compute_dtype)    # GN2+SiLU+conv2+add
    return jnp.transpose(out.reshape(N, H, W, Cout), (0, 3, 1, 2))   # back to NCHW


# ------------------------------------------------------------------
# Pure-JAX reference
# ------------------------------------------------------------------
def _ref_forward(x_nchw, temb, p, num_groups=32):
    x = jnp.transpose(x_nchw, (0, 2, 3, 1))

    def gn_silu(x, g, b):
        N, H, W, C = x.shape
        G = num_groups
        xg = x.reshape(N, H * W, G, C // G)
        m = xg.mean(axis=(1, 3), keepdims=True)
        v = xg.var(axis=(1, 3), keepdims=True)
        y = ((xg - m) / jnp.sqrt(v + 1e-6)).reshape(N, H, W, C) * g + b
        return y * jax.nn.sigmoid(y)

    def conv(x, w, b):
        return jax.lax.conv_general_dilated(
            x, w, (1, 1), "SAME",
            dimension_numbers=("NHWC", "HWIO", "NHWC")) + b

    h = gn_silu(x, p["gamma1"], p["beta1"])
    h = conv(h, p["w1"], p["b1"])
    t = temb * jax.nn.sigmoid(temb)
    t = t @ p["wt"] + p["bt"]
    h = h + t[:, None, None, :]
    h = gn_silu(h, p["gamma2"], p["beta2"])
    h = conv(h, p["w2"], p["b2"])
    xs = x @ p["wn"] + p["bn"] if "wn" in p else x
    return jnp.transpose(xs + h, (0, 3, 1, 2))


def make_params(key, Cin, Cout, Temb):
    ks = jax.random.split(key, 12)
    p = dict(
        gamma1=1.0 + 0.1 * jax.random.normal(ks[0], (Cin,), jnp.float32),
        beta1=0.1 * jax.random.normal(ks[1], (Cin,), jnp.float32),
        w1=0.05 * jax.random.normal(ks[2], (3, 3, Cin, Cout), jnp.float32),
        b1=0.05 * jax.random.normal(ks[3], (Cout,), jnp.float32),
        wt=0.05 * jax.random.normal(ks[4], (Temb, Cout), jnp.float32),
        bt=0.05 * jax.random.normal(ks[5], (Cout,), jnp.float32),
        gamma2=1.0 + 0.1 * jax.random.normal(ks[6], (Cout,), jnp.float32),
        beta2=0.1 * jax.random.normal(ks[7], (Cout,), jnp.float32),
        w2=0.05 * jax.random.normal(ks[8], (3, 3, Cout, Cout), jnp.float32),
        b2=0.05 * jax.random.normal(ks[9], (Cout,), jnp.float32),
    )
    if Cin != Cout:
        p["wn"] = 0.05 * jax.random.normal(ks[10], (Cin, Cout), jnp.float32)
        p["bn"] = 0.05 * jax.random.normal(ks[11], (Cout,), jnp.float32)
    return p


if __name__ == "__main__":
    N, H, W, Temb, G = 2, 8, 8, 64, 32
    key = jax.random.PRNGKey(0)
    k1, k2, k3, k4 = jax.random.split(key, 4)

    # ---- case 1: in_channels != out_channels (1x1 nin_shortcut path) ----
    Cin, Cout = 32, 64
    x = jax.random.normal(k1, (N, Cin, H, W), jnp.float32)
    temb = jax.random.normal(k2, (N, Temb), jnp.float32)
    p = make_params(k3, Cin, Cout, Temb)

    out_bf16 = jax.block_until_ready(
        resnet_block_forward(x, temb, p, num_groups=G, compute_dtype=jnp.bfloat16))
    out_f32 = jax.block_until_ready(
        resnet_block_forward(x, temb, p, num_groups=G, compute_dtype=jnp.float32))
    ref = _ref_forward(x, temb, p, num_groups=G)
    assert out_bf16.shape == (N, Cout, H, W)
    assert jnp.allclose(out_f32, ref, atol=2e-3, rtol=2e-3), \
        f"f32 max err {float(jnp.max(jnp.abs(out_f32 - ref)))}"
    assert jnp.allclose(out_bf16, ref, atol=4e-2, rtol=4e-2), \
        f"bf16 max err {float(jnp.max(jnp.abs(out_bf16 - ref)))}"

    # ---- case 2: in_channels == out_channels (identity shortcut path) ----
    C = 64
    x2 = jax.random.normal(k4, (N, C, H, W), jnp.float32)
    p2 = make_params(k3, C, C, Temb)
    out2 = jax.block_until_ready(
        resnet_block_forward(x2, temb, p2, num_groups=G, compute_dtype=jnp.bfloat16))
    ref2 = _ref_forward(x2, temb, p2, num_groups=G)
    assert jnp.allclose(out2, ref2, atol=4e-2, rtol=4e-2), \
        f"identity-shortcut max err {float(jnp.max(jnp.abs(out2 - ref2)))}"

    print("KERNEL_OK")
</pallas_src>

<mosaic_0001>
module attributes {stable_mosaic.version = 11 : i64} {
  func.func @_silu_linear_kernel(%arg0: i32, %arg1: memref<2x64xf32, #tpu.memory_space<vmem>>, %arg2: memref<64x64xf32, #tpu.memory_space<vmem>>, %arg3: memref<1x64xf32, #tpu.memory_space<vmem>>, %arg4: memref<2x64xf32, #tpu.memory_space<vmem>>) attributes {dimension_semantics = [#tpu.dimension_semantics<arbitrary>], iteration_bounds = array<i64: 1>, scalar_prefetch = 0 : i64, scratch_operands = 0 : i64, tpu.core_type = #tpu.core_type<tc>, window_params = [{pipeline_mode = #tpu.pipeline_mode<synchronous>, transform_indices = @transform_0, window_bounds = array<i64: 2, 64>}, {pipeline_mode = #tpu.pipeline_mode<synchronous>, transform_indices = @transform_1, window_bounds = array<i64: 64, 64>}, {pipeline_mode = #tpu.pipeline_mode<synchronous>, transform_indices = @transform_2, window_bounds = array<i64: 1, 64>}, {pipeline_mode = #tpu.pipeline_mode<synchronous>, transform_indices = @transform_3, window_bounds = array<i64: 2, 64>}]} {
    %c0 = arith.constant 0 : index
    %c0_0 = arith.constant 0 : index
    %0 = vector.load %arg1[%c0, %c0_0] : memref<2x64xf32, #tpu.memory_space<vmem>>, vector<2x64xf32>
    %1 = arith.negf %0 : vector<2x64xf32>
    %2 = math.exp %1 : vector<2x64xf32>
    %cst = arith.constant 1.000000e+00 : f32
    %3 = vector.broadcast %cst : f32 to vector<2x64xf32>
    %4 = arith.addf %3, %2 : vector<2x64xf32>
    %5 = arith.divf %3, %4 : vector<2x64xf32>
    %6 = arith.mulf %0, %5 : vector<2x64xf32>
    %c0_1 = arith.constant 0 : index
    %c0_2 = arith.constant 0 : index
    %7 = vector.load %arg2[%c0_1, %c0_2] : memref<64x64xf32, #tpu.memory_space<vmem>>, vector<64x64xf32>
    %cst_3 = arith.constant dense<0.000000e+00> : vector<2x64xf32>
    %8 = tpu.matmul %6, %7, %cst_3 {dimension_numbers = #tpu.dot_dimension_numbers<[1], [0], [0], [1], [0, 0, 1, 1], [], []>} : vector<2x64xf32>, vector<64x64xf32>, vector<2x64xf32> -> vector<2x64xf32>
    %c0_4 = arith.constant 0 : index
    %c0_5 = arith.constant 0 : index
    %9 = vector.load %arg3[%c0_4, %c0_5] : memref<1x64xf32, #tpu.memory_space<vmem>>, vector<1x64xf32>
    %10 = vector.broadcast %9 : vector<1x64xf32> to vector<2x64xf32>
    %11 = arith.addf %8, %10 : vector<2x64xf32>
    %c0_6 = arith.constant 0 : index
    %c0_7 = arith.constant 0 : index
    %12 = vector.load %arg4[%c0_6, %c0_7] : memref<2x64xf32, #tpu.memory_space<vmem>>, vector<2x64xf32>
    tpu.vector_store %arg4[%c0_6, %c0_7], %11 {strides = array<i32>} : memref<2x64xf32, #tpu.memory_space<vmem>>, vector<2x64xf32>,
    return
  }
  func.func @transform_0(%arg0: i32) -> (i32, i32) {
    %c0_i32 = arith.constant 0 : i32
    %c0_i32_0 = arith.constant 0 : i32
    %c0_i32_1 = arith.constant 0 : i32
    return %c0_i32, %c0_i32_0 : i32, i32
  }
  func.func @transform_1(%arg0: i32) -> (i32, i32) {
    %c0_i32 = arith.constant 0 : i32
    %c0_i32_0 = arith.constant 0 : i32
    %c0_i32_1 = arith.constant 0 : i32
    return %c0_i32, %c0_i32_0 : i32, i32
  }
  func.func @transform_2(%arg0: i32) -> (i32, i32) {
    %c0_i32 = arith.constant 0 : i32
    %c0_i32_0 = arith.constant 0 : i32
    %c0_i32_1 = arith.constant 0 : i32
    return %c0_i32, %c0_i32_0 : i32, i32
  }
  func.func @transform_3(%arg0: i32) -> (i32, i32) {
    %c0_i32 = arith.constant 0 : i32
    %c0_i32_0 = arith.constant 0 : i32
    %c0_i32_1 = arith.constant 0 : i32
    return %c0_i32, %c0_i32_0 : i32, i32
  }
}

</mosaic_0001>

<llo_original>
// kernel: tpu_custom_call.1
$region0: #{tpu_custom_call.1}
  #allocation0 [shape = 'u32[]', space=smem, size = 0x4, offset = 0x4, fixed_abs, tag = 'smem constant byte address 0x4 - core index']
  #allocation1 [shape = 'u32[144,128]{1,0:T(1,128)}', space=vmem, size = 0x12000, scoped, tag = 'internal scratch']
  %s0 = inlined_call_operand.hbm [shape: f32[2,64], index: 0, kind: input, shape index: {}]
  %s1 = inlined_call_operand.hbm [shape: f32[64,64], index: 1, kind: input, shape index: {}]
  %s2 = inlined_call_operand.vmem [shape: f32[1,64], index: 2, kind: input, shape index: {}]
  %s3 = inlined_call_operand.hbm [shape: f32[2,64], index: 3, kind: output, shape index: {}]
  %s4 = sld [smem:[#allocation0]]
  $region30: #{tpu_custom_call.1} parent=0
    _
  %s6 = ssub.s32 1, %s4
  %s7 = scalar_select 0, %s6, %s4
  $region1: #{tpu_custom_call.1} parent=0
    #allocation2 [shape = 'u8[1024]{0}', space=vmem, size = 0x400, scoped, tag = 'input window, operand 0, single buffered']
    #allocation3 [shape = 's32[1]{0}', space=sflag, size = 0x4, scoped, tag = 'scoped memory for tpu_custom_call.1']
    #allocation4 [shape = 's32[1]{0}', space=sflag, size = 0x4, scoped, tag = 'scoped memory for tpu_custom_call.1']
    #allocation5 [shape = 'u8[32768]{0}', space=vmem, size = 0x8000, scoped, tag = 'input window, operand 1, single buffered']
    #allocation6 [shape = 's32[1]{0}', space=sflag, size = 0x4, scoped, tag = 'scoped memory for tpu_custom_call.1']
    #allocation7 [shape = 'u8[1024]{0}', space=vmem, size = 0x400, scoped, tag = 'output window, operand 0, single buffered']
    %8 = vsyncpa [#allocation3], 0
    %9 = vsyncpa [#allocation6], 0
    %10 = vsyncpa [#allocation4], 0
    // Predicated region
    $region2: #{tpu_custom_call.1} parent=1 // pred_check
      _
    $region3: #{tpu_custom_call.1} parent=1 // pred_check_branch
      %12 = sbr.rel (0) target = $region5
    $region4: #{tpu_custom_call.1} parent=1 // pred_region
      %s14 = ssub.s32 32, 32
      %15 = vsyncadd [#allocation3], %s14
      %s17 = sshll.u32 [#allocation2], 4
      %s18 = int_to_ptr.vmem [resolvable:$true] %s17
      %20 = dma.hbm_to_vmem [thread:$0]  %s0, 32, %s18, [#allocation3]
    $region5: #{tpu_custom_call.1} parent=1 // pred_fallthru
      _
    // Predicated region
    $region6: #{tpu_custom_call.1} parent=1 // pred_check
      _
    $region7: #{tpu_custom_call.1} parent=1 // pred_check_branch
      %22 = sbr.rel (0) target = $region9
    $region8: #{tpu_custom_call.1} parent=1 // pred_region
      %s24 = ssub.s32 1024, 1024
      %25 = vsyncadd [#allocation6], %s24
      %s26 = sshll.u32 [#allocation5], 4
      %s27 = int_to_ptr.vmem [resolvable:$true] %s26
      %32 = dma.hbm_to_vmem [thread:$0]  %s1, 1024, %s27, [#allocation6], 128, 128, 8
    $region9: #{tpu_custom_call.1} parent=1 // pred_fallthru
      _
    // Predicated region
    $region10: #{tpu_custom_call.1} parent=1 // pred_check
      _
    $region11: #{tpu_custom_call.1} parent=1 // pred_check_branch
      %34 = sbr.rel (0) target = $region13
    $region12: #{tpu_custom_call.1} parent=1 // pred_region
      _
    $region13: #{tpu_custom_call.1} parent=1 // pred_fallthru
      _
    // Predicated region
    $region14: #{tpu_custom_call.1} parent=1 // pred_check
      _
    $region15: #{tpu_custom_call.1} parent=1 // pred_check_branch
      %36 = sbr.rel (0) target = $region17
    $region16: #{tpu_custom_call.1} parent=1 // pred_region
      %37 = dma.done [#allocation3], 32
    $region17: #{tpu_custom_call.1} parent=1 // pred_fallthru
      _
    // Predicated region
    $region18: #{tpu_custom_call.1} parent=1 // pred_check
      _
    $region19: #{tpu_custom_call.1} parent=1 // pred_check_branch
      %39 = sbr.rel (0) target = $region21
    $region20: #{tpu_custom_call.1} parent=1 // pred_region
      %40 = dma.done [#allocation6], 1024
    $region21: #{tpu_custom_call.1} parent=1 // pred_fallthru
      _
    %v41 = vld [vmem:[#allocation2] sm:$0x3]
    %v42 = vxor.u32 %v41, 2147483648
    %v43 = vmul.f32 %v42, 1.442695
    %v44 = vpow.pop %v43
    %v45 = vadd.f32 %v44, 1.0
    %v46 = vrcp.pop %v45
    %v47 = vmul.f32 1.0, %v46
    %v48 = vmul.f32 %v41, %v47
    %v49 = vld [vmem:[#allocation5] sm:$0xff]
    %v50 = vld [vmem:[#allocation5 + $0x8] sm:$0xff]
    %v51 = vld [vmem:[#allocation5 + $0x10] sm:$0xff]
    %v52 = vld [vmem:[#allocation5 + $0x18] sm:$0xff]
    %v53 = vld [vmem:[#allocation5 + $0x20] sm:$0xff]
    %v54 = vld [vmem:[#allocation5 + $0x28] sm:$0xff]
    %v55 = vld [vmem:[#allocation5 + $0x30] sm:$0xff]
    %v56 = vld [vmem:[#allocation5 + $0x38] sm:$0xff]
    %v57 = vld [vmem:[%s2] sm:$0x1]
    %v59 = vlaneseq
    %v60 = vshrl.u32 %v59, 7
    %v61 = vsub.s32 0, %v60
    %v62 = vrot.slane %v57, %v61
    %vm64 = vcmask 523264
    %v66 = vsel %vm64, %v48, 0
    %68 = vmatprep.subr.mxu0 0.0
    %69 = vmatpush1.msra.mxu0 %v49
    %70 = vmatprep.subr.mxu0 0.0
    %71 = vmatpush1.msra.mxu0 %v50
    %72 = vmatprep.subr.mxu0 0.0
    %73 = vmatpush1.msra.mxu0 %v51
    %74 = vmatprep.subr.mxu0 0.0
    %75 = vmatpush1.msra.mxu0 %v52
    %76 = vmatprep.subr.mxu0 0.0
    %77 = vmatpush1.msra.mxu0 %v53
    %78 = vmatprep.subr.mxu0 0.0
    %79 = vmatpush1.msra.mxu0 %v54
    %80 = vmatprep.subr.mxu0 0.0
    %81 = vmatpush1.msra.mxu0 %v55
    %82 = vmatprep.subr.mxu0 0.0
    %83 = vmatpush1.msra.mxu0 %v56
    %84 = vmatprep.subr.mxu0 0.0
    %85 = vmatpush1.msra.mxu0 0.0
    %86 = vmatprep.subr.mxu0 0.0
    %87 = vmatpush1.msra.mxu0 0.0
    %88 = vmatprep.subr.mxu0 0.0
    %89 = vmatpush1.msra.mxu0 0.0
    %90 = vmatprep.subr.mxu0 0.0
    %91 = vmatpush1.msra.mxu0 0.0
    %92 = vmatprep.subr.mxu0 0.0
    %93 = vmatpush1.msra.mxu0 0.0
    %94 = vmatprep.subr.mxu0 0.0
    %95 = vmatpush1.msra.mxu0 0.0
    %96 = vmatprep.subr.mxu0 0.0
    %97 = vmatpush1.msra.mxu0 0.0
    %98 = vmatprep.subr.mxu0 0.0
    %99 = vmatpush1.msra.mxu0 0.0
    %100 = vmatprep.subr.mxu0 0.0
    %101 = vmatpush1.msra.mxu0 0.0
    %102 = vmatprep.subr.mxu0 0.0
    %103 = vmatpush1.msra.mxu0 0.0
    %104 = vmatprep.subr.mxu0 0.0
    %105 = vmatpush1.msra.mxu0 0.0
    %106 = vmatprep.subr.mxu0 0.0
    %107 = vmatpush1.msra.mxu0 0.0
    %108 = vmatprep.subr.mxu0 0.0
    %109 = vmatpush1.msra.mxu0 0.0
    %110 = vmatprep.subr.mxu0 0.0
    %111 = vmatpush1.msra.mxu0 0.0
    %112 = vmatprep.subr.mxu0 0.0
    %113 = vmatpush1.msra.mxu0 0.0
    %114 = vmatprep.subr.mxu0 0.0
    %115 = vmatpush1.msra.mxu0 0.0
    %116 = vmatprep.subr.mxu0 0.0
    %117 = vmatpush1.msra.mxu0 0.0
    %118 = vmatprep.subr.mxu0 0.0
    %119 = vmatpush1.msra.mxu0 0.0
    %120 = vmatprep.subr.mxu0 0.0
    %121 = vmatpush1.msra.mxu0 0.0
    %122 = vmatprep.subr.mxu0 0.0
    %123 = vmatpush1.msra.mxu0 0.0
    %124 = vmatprep.subr.mxu0 0.0
    %125 = vmatpush1.msra.mxu0 0.0
    %126 = vmatprep.subr.mxu0 0.0
    %127 = vmatpush1.msra.mxu0 0.0
    %128 = vmatprep.subr.mxu0 0.0
    %129 = vmatpush1.msra.mxu0 0.0
    %130 = vmatprep.subr.mxu0 0.0
    %131 = vmatpush1.msra.mxu0 0.0
    %132 = vmatprep.mubr.f32.mxu0 0.0
    %133 = vmatmul.mubr.f32.gmra.mrb[0].mxu0 %v66
    %v134 = vpop.f32.mrb[0].mxu0
    %v135 = vadd.f32 %v62, %v134
    %v136 = vpop.f32.mrb[0].mxu0
    %137 = vdwg.mxu0
    %vm138 = vcmask 517120
    %139 = vst.msk [vmem:[#allocation7] sm:$0x3] %vm138, %v135
    // Predicated region
    $region22: #{tpu_custom_call.1} parent=1 // pred_check
      _
    $region23: #{tpu_custom_call.1} parent=1 // pred_check_branch
      %141 = sbr.rel (0) target = $region25
    $region24: #{tpu_custom_call.1} parent=1 // pred_region
      %s143 = ssub.s32 32, 32
      %144 = vsyncadd [#allocation4], %s143
      %s146 = sshll.u32 [#allocation7], 4
      %s147 = int_to_ptr.vmem [resolvable:$true] %s146
      %149 = dma.vmem_to_hbm [thread:$0]  %s147, 32, %s3, [#allocation4]
    $region25: #{tpu_custom_call.1} parent=1 // pred_fallthru
      _
    // Predicated region
    $region26: #{tpu_custom_call.1} parent=1 // pred_check
      _
    $region27: #{tpu_custom_call.1} parent=1 // pred_check_branch
      %151 = sbr.rel (0) target = $region29
    $region28: #{tpu_custom_call.1} parent=1 // pred_region
      %152 = dma.done [#allocation4], 32
    $region29: #{tpu_custom_call.1} parent=1 // pred_fallthru
      _
    %153 = vsyncpa [#allocation3], 1
    %154 = vsyncpa [#allocation6], 1
    %155 = vsyncpa [#allocation4], 1

</llo_original>
